<compile_context>
chip_gen: v5e
topology: v5e:2x2
jax: 0.10.0
libtpu: 0.0.40
codegen_flags: <defaults>
</compile_context>

<pallas_src>
import functools

import jax
import jax.numpy as jnp
from jax.experimental import pallas as pl
from jax.experimental.pallas import tpu as pltpu


def _round_up(x, m):
    return (x + m - 1) // m * m


def _embed_ln_kernel(x_ref, w_ref, b_ref, g_ref, beta_ref, o_ref, *,
                     n_real, has_sum_col):
    # x_ref:    (TM, K)  bf16 patch rows
    # w_ref:    (K, Np)  bf16 weight; cols [0, n_real) real, col n_real (when
    #           has_sum_col) holds W.sum(axis=1) so the MXU emits the row sum
    #           for free, remaining cols zero.
    # b_ref, g_ref, beta_ref: (1, Np) f32; bias col n_real holds sum(bias),
    #           gamma/beta are zero on every padded column.
    # o_ref:    (TM, Np) bf16
    y = jnp.dot(x_ref[...], w_ref[...], preferred_element_type=jnp.float32)
    y = y + b_ref[...]

    inv_n = jnp.float32(1.0 / n_real)
    if has_sum_col:
        # Row sum arrives from the MXU in the spare column; only the
        # sum-of-squares reduction remains on the XLU.  All other padded
        # columns are exactly 0, so subtracting s*s removes the spare
        # column's contribution exactly.
        s = y[:, n_real:n_real + 1]
        ss = jnp.sum(y * y, axis=-1, keepdims=True) - s * s
    else:
        s = jnp.sum(y, axis=-1, keepdims=True)
        ss = jnp.sum(y * y, axis=-1, keepdims=True)

    mean = s * inv_n
    # One-pass variance (E[y^2] - mean^2); fine for conv-init-scale
    # activations.  Switch to the mean-subtracted two-pass form if |mean| >>
    # std ever matters for training parity.
    var = ss * inv_n - mean * mean
    y_norm = (y - mean) * jax.lax.rsqrt(var + jnp.float32(1e-5))
    # gamma/beta are zero on padded columns -> padded output columns are 0.
    o_ref[...] = (y_norm * g_ref[...] + beta_ref[...]).astype(o_ref.dtype)


def prepare_embeddings2d_params(proj_w, proj_b, ln_gamma, ln_beta):
    """One-time parameter prep (hoisted out of the per-call forward).

    Reshapes the Conv2d weight to (K, Np) bf16 with the embed dim padded to a
    lane multiple (128), appends the row-sum column used by the kernel, and
    pads bias / gamma / beta to match.
    """
    E, C, ph, pw = proj_w.shape
    K = C * ph * pw
    N = E
    Np = _round_up(N, 128)
    has_sum_col = Np > N

    w2d = proj_w.reshape(E, K).T.astype(jnp.float32)          # (K, N)
    b1 = proj_b.astype(jnp.float32)
    g1 = ln_gamma.astype(jnp.float32)
    beta1 = ln_beta.astype(jnp.float32)

    if has_sum_col:
        pad = Np - N - 1
        w_sum = jnp.sum(w2d, axis=1, keepdims=True)            # (K, 1)
        w2d = jnp.concatenate(
            [w2d, w_sum, jnp.zeros((K, pad), jnp.float32)], axis=1)
        b1 = jnp.concatenate(
            [b1, jnp.sum(b1)[None], jnp.zeros((pad,), jnp.float32)])
        g1 = jnp.pad(g1, (0, Np - N))
        beta1 = jnp.pad(beta1, (0, Np - N))

    return dict(
        w=w2d.astype(jnp.bfloat16),          # (K, Np) bf16, MXU operand
        b=b1.reshape(1, Np),
        gamma=g1.reshape(1, Np),
        beta=beta1.reshape(1, Np),
        n_real=N,
        n_pad=Np,
        k=K,
        patch=(ph, pw),
        has_sum_col=has_sum_col,
    )


def embeddings2d_forward(x, params, *, img_size=16, row_tile=1024,
                         out_dtype=jnp.bfloat16):
    """x: (B, C, H, W) float32.  Returns (embeddings (B, num_patches, E) in
    `out_dtype`, patched_dimensions)."""
    B, C, H, W = x.shape
    ph, pw = params["patch"]
    K = params["k"]
    N = params["n_real"]
    Np = params["n_pad"]

    # ---- glue: resize to (img_size, img_size)
    # TODO(synk): torchvision transforms.Resize uses antialiased bilinear by
    # default; jax.image.resize(method="linear") has no antialias, so
    # downscaled inputs differ slightly from the PyTorch module.
    if (H, W) != (img_size, img_size):
        x = jax.image.resize(x, (B, C, img_size, img_size), method="linear")
        H = W = img_size

    # ---- glue: maybe_pad (no-op when patch_size divides img_size)
    pad_h = (-H) % ph
    pad_w = (-W) % pw
    if pad_h or pad_w:
        x = jnp.pad(x, ((0, 0), (0, 0), (0, pad_h), (0, pad_w)))
        H += pad_h
        W += pad_w

    Hp, Wp = H // ph, W // pw
    num_patches = Hp * Wp
    M = B * num_patches

    # ---- glue: patch extraction -> (M, K), written ONCE in bf16 (transpose +
    # cast are one producer; allow_input_fusion below lets XLA try to fold it
    # into the Pallas input DMA).  K ordered (c, ki, kj) to match Conv2d.
    # TODO(synk): fully in-kernel patch extraction (BlockSpec over the 6-D
    # view) would remove this intermediate array entirely if XLA declines to
    # fuse the 6-D transpose.
    patches = x.reshape(B, C, Hp, ph, Wp, pw)
    patches = patches.transpose(0, 2, 4, 1, 3, 5)            # (B, Hp, Wp, C, p, p)
    patches = patches.reshape(M, K).astype(jnp.bfloat16)     # (M, K) bf16

    # ---- row tiling: split M into near-equal tiles (minimal padding); force
    # >=2 (even) grid steps when possible so v7x can shard the parallel axis
    # across both TensorCores.
    num_steps = max(pl.cdiv(M, row_tile), 1)
    if M >= 16:
        num_steps = max(num_steps, 2)
    if num_steps > 1 and num_steps % 2:
        num_steps += 1
    TM = _round_up(pl.cdiv(M, num_steps), 8)
    Mp = _round_up(M, TM)
    if Mp != M:
        patches = jnp.pad(patches, ((0, Mp - M), (0, 0)))
    grid = (Mp // TM,)

    kernel = functools.partial(
        _embed_ln_kernel, n_real=N, has_sum_col=params["has_sum_col"])

    # Weight / bias / gamma / beta use a constant index_map so they stay
    # VMEM-resident across the grid (the runtime skips re-DMA on an unchanged
    # block index).
    out = pl.pallas_call(
        kernel,
        out_shape=jax.ShapeDtypeStruct((Mp, Np), out_dtype),
        grid=grid,
        in_specs=[
            pl.BlockSpec((TM, K), lambda i: (i, 0)),   # patch rows (tiled)
            pl.BlockSpec((K, Np), lambda i: (0, 0)),   # weight (resident)
            pl.BlockSpec((1, Np), lambda i: (0, 0)),   # bias
            pl.BlockSpec((1, Np), lambda i: (0, 0)),   # gamma
            pl.BlockSpec((1, Np), lambda i: (0, 0)),   # beta
        ],
        out_specs=pl.BlockSpec((TM, Np), lambda i: (i, 0)),
        compiler_params=pltpu.CompilerParams(
            dimension_semantics=("parallel",),
            vmem_limit_bytes=48 * 1024 * 1024,
            allow_input_fusion=[True, False, False, False, False],
        ),
    )(patches, params["w"], params["b"], params["gamma"], params["beta"])

    if (Mp, Np) != (M, N):
        out = out[:M, :N]
    out = out.reshape(B, num_patches, N)
    return out, (Hp, Wp)


if __name__ == "__main__":
    # Small shapes consistent with the module:
    # batch=2, channels=4, spatial=16x16, patch_size=4, embed_dim=32, img_size=16
    B, C, H, W = 2, 4, 16, 16
    patch_size = 4
    embed_dim = 32
    img_size = 16

    key = jax.random.PRNGKey(0)
    k_x, k_w, k_b = jax.random.split(key, 3)

    x = jax.random.normal(k_x, (B, C, H, W), dtype=jnp.float32)

    # Deterministic parameter init (synthetic; conv_init in the original is a
    # custom initializer — we only need deterministic values of the right shape).
    proj_w = 0.02 * jax.random.normal(
        k_w, (embed_dim, C, patch_size, patch_size), dtype=jnp.float32)
    proj_b = 0.01 * jax.random.normal(k_b, (embed_dim,), dtype=jnp.float32)
    ln_gamma = jnp.ones((embed_dim,), dtype=jnp.float32)
    ln_beta = jnp.zeros((embed_dim,), dtype=jnp.float32)

    params = prepare_embeddings2d_params(proj_w, proj_b, ln_gamma, ln_beta)
    out, patched_dims = embeddings2d_forward(x, params, img_size=img_size)
    out = jax.block_until_ready(out)

    # Reference in plain JAX (patch conv as matmul + LayerNorm), with the same
    # bf16 rounding of the matmul operands as the kernel (f32 accumulation,
    # f32 LayerNorm).
    Hp, Wp = H // patch_size, W // patch_size
    patches_ref = x.reshape(B, C, Hp, patch_size, Wp, patch_size)
    patches_ref = patches_ref.transpose(0, 2, 4, 1, 3, 5).reshape(B, Hp * Wp, -1)
    w_ref = proj_w.reshape(embed_dim, -1).T
    y_ref = jnp.einsum(
        "bmk,kn->bmn",
        patches_ref.astype(jnp.bfloat16).astype(jnp.float32),
        w_ref.astype(jnp.bfloat16).astype(jnp.float32)) + proj_b
    mu = y_ref.mean(-1, keepdims=True)
    var = ((y_ref - mu) ** 2).mean(-1, keepdims=True)
    ref = (y_ref - mu) / jnp.sqrt(var + 1e-5) * ln_gamma + ln_beta

    assert out.shape == (B, Hp * Wp, embed_dim)
    assert out.dtype == jnp.bfloat16
    assert patched_dims == (Hp, Wp)
    err = float(jnp.max(jnp.abs(out.astype(jnp.float32) - ref)))
    assert err < 3e-2, f"mismatch vs reference: max abs err {err}"

    print("KERNEL_OK")
</pallas_src>

<mosaic_0001>
module attributes {stable_mosaic.version = 11 : i64} {
  func.func @_embed_ln_kernel(%arg0: i32, %arg1: memref<16x64xbf16, #tpu.memory_space<vmem>>, %arg2: memref<64x128xbf16, #tpu.memory_space<vmem>>, %arg3: memref<1x128xf32, #tpu.memory_space<vmem>>, %arg4: memref<1x128xf32, #tpu.memory_space<vmem>>, %arg5: memref<1x128xf32, #tpu.memory_space<vmem>>, %arg6: memref<16x128xbf16, #tpu.memory_space<vmem>>) attributes {dimension_semantics = [#tpu.dimension_semantics<parallel>], iteration_bounds = array<i64: 2>, scalar_prefetch = 0 : i64, scratch_operands = 0 : i64, tpu.core_type = #tpu.core_type<tc>, window_params = [{transform_indices = @transform_0, window_bounds = array<i64: 16, 64>}, {pipeline_mode = #tpu.pipeline_mode<synchronous>, transform_indices = @transform_1, window_bounds = array<i64: 64, 128>}, {pipeline_mode = #tpu.pipeline_mode<synchronous>, transform_indices = @transform_2, window_bounds = array<i64: 1, 128>}, {pipeline_mode = #tpu.pipeline_mode<synchronous>, transform_indices = @transform_3, window_bounds = array<i64: 1, 128>}, {pipeline_mode = #tpu.pipeline_mode<synchronous>, transform_indices = @transform_4, window_bounds = array<i64: 1, 128>}, {transform_indices = @transform_5, window_bounds = array<i64: 16, 128>}]} {
    %c0 = arith.constant 0 : index
    %c0_0 = arith.constant 0 : index
    %0 = vector.load %arg1[%c0, %c0_0] : memref<16x64xbf16, #tpu.memory_space<vmem>>, vector<16x64xbf16>
    %c0_1 = arith.constant 0 : index
    %c0_2 = arith.constant 0 : index
    %1 = vector.load %arg2[%c0_1, %c0_2] : memref<64x128xbf16, #tpu.memory_space<vmem>>, vector<64x128xbf16>
    %cst = arith.constant dense<0.000000e+00> : vector<16x128xf32>
    %2 = tpu.matmul %0, %1, %cst {dimension_numbers = #tpu.dot_dimension_numbers<[1], [0], [0], [1], [0, 0, 1, 1], [], []>} : vector<16x64xbf16>, vector<64x128xbf16>, vector<16x128xf32> -> vector<16x128xf32>
    %c0_3 = arith.constant 0 : index
    %c0_4 = arith.constant 0 : index
    %3 = vector.load %arg3[%c0_3, %c0_4] : memref<1x128xf32, #tpu.memory_space<vmem>>, vector<1x128xf32>
    %4 = vector.broadcast %3 : vector<1x128xf32> to vector<16x128xf32>
    %5 = arith.addf %2, %4 : vector<16x128xf32>
    %6 = vector.extract_strided_slice %5 {offsets = [0, 32], sizes = [16, 1], strides = [1, 1]} : vector<16x128xf32> to vector<16x1xf32>
    %7 = arith.mulf %5, %5 : vector<16x128xf32>
    %cst_5 = arith.constant dense<0.000000e+00> : vector<16xf32>
    %8 = vector.multi_reduction <add>, %7, %cst_5 [1] : vector<16x128xf32> to vector<16xf32>
    %9 = vector.shape_cast %8 : vector<16xf32> to vector<16x1xf32>
    %10 = arith.mulf %6, %6 : vector<16x1xf32>
    %11 = arith.subf %9, %10 : vector<16x1xf32>
    %cst_6 = arith.constant 3.125000e-02 : f32
    %12 = vector.broadcast %cst_6 : f32 to vector<16x1xf32>
    %13 = arith.mulf %6, %12 : vector<16x1xf32>
    %cst_7 = arith.constant 3.125000e-02 : f32
    %14 = vector.broadcast %cst_7 : f32 to vector<16x1xf32>
    %15 = arith.mulf %11, %14 : vector<16x1xf32>
    %16 = arith.mulf %13, %13 : vector<16x1xf32>
    %17 = arith.subf %15, %16 : vector<16x1xf32>
    %18 = vector.broadcast %13 : vector<16x1xf32> to vector<16x128xf32>
    %19 = arith.subf %5, %18 : vector<16x128xf32>
    %cst_8 = arith.constant 9.99999974E-6 : f32
    %20 = vector.broadcast %cst_8 : f32 to vector<16x1xf32>
    %21 = arith.addf %17, %20 : vector<16x1xf32>
    %22 = math.rsqrt %21 : vector<16x1xf32>
    %23 = vector.broadcast %22 : vector<16x1xf32> to vector<16x128xf32>
    %24 = arith.mulf %19, %23 : vector<16x128xf32>
    %c0_9 = arith.constant 0 : index
    %c0_10 = arith.constant 0 : index
    %25 = vector.load %arg4[%c0_9, %c0_10] : memref<1x128xf32, #tpu.memory_space<vmem>>, vector<1x128xf32>
    %26 = vector.broadcast %25 : vector<1x128xf32> to vector<16x128xf32>
    %27 = arith.mulf %24, %26 : vector<16x128xf32>
    %c0_11 = arith.constant 0 : index
    %c0_12 = arith.constant 0 : index
    %28 = vector.load %arg5[%c0_11, %c0_12] : memref<1x128xf32, #tpu.memory_space<vmem>>, vector<1x128xf32>
    %29 = vector.broadcast %28 : vector<1x128xf32> to vector<16x128xf32>
    %30 = arith.addf %27, %29 : vector<16x128xf32>
    %31 = arith.truncf %30 : vector<16x128xf32> to vector<16x128xbf16>
    %c0_13 = arith.constant 0 : index
    %c0_14 = arith.constant 0 : index
    %32 = vector.load %arg6[%c0_13, %c0_14] : memref<16x128xbf16, #tpu.memory_space<vmem>>, vector<16x128xbf16>
    tpu.vector_store %arg6[%c0_13, %c0_14], %31 {strides = array<i32>} : memref<16x128xbf16, #tpu.memory_space<vmem>>, vector<16x128xbf16>,
    return
  }
  func.func @transform_0(%arg0: i32) -> (i32, i32) {
    %c0_i32 = arith.constant 0 : i32
    %c0_i32_0 = arith.constant 0 : i32
    return %arg0, %c0_i32 : i32, i32
  }
  func.func @transform_1(%arg0: i32) -> (i32, i32) {
    %c0_i32 = arith.constant 0 : i32
    %c0_i32_0 = arith.constant 0 : i32
    %c0_i32_1 = arith.constant 0 : i32
    return %c0_i32, %c0_i32_0 : i32, i32
  }
  func.func @transform_2(%arg0: i32) -> (i32, i32) {
    %c0_i32 = arith.constant 0 : i32
    %c0_i32_0 = arith.constant 0 : i32
    %c0_i32_1 = arith.constant 0 : i32
    return %c0_i32, %c0_i32_0 : i32, i32
  }
  func.func @transform_3(%arg0: i32) -> (i32, i32) {
    %c0_i32 = arith.constant 0 : i32
    %c0_i32_0 = arith.constant 0 : i32
    %c0_i32_1 = arith.constant 0 : i32
    return %c0_i32, %c0_i32_0 : i32, i32
  }
  func.func @transform_4(%arg0: i32) -> (i32, i32) {
    %c0_i32 = arith.constant 0 : i32
    %c0_i32_0 = arith.constant 0 : i32
    %c0_i32_1 = arith.constant 0 : i32
    return %c0_i32, %c0_i32_0 : i32, i32
  }
  func.func @transform_5(%arg0: i32) -> (i32, i32) {
    %c0_i32 = arith.constant 0 : i32
    %c0_i32_0 = arith.constant 0 : i32
    return %arg0, %c0_i32 : i32, i32
  }
}

</mosaic_0001>

<llo_original>
// kernel: tpu_custom_call.1
$region0: #{tpu_custom_call.1}
  #allocation0 [shape = 'u32[]', space=smem, size = 0x4, offset = 0x4, fixed_abs, tag = 'smem constant byte address 0x4 - core index']
  #allocation1 [shape = 'u32[72,128]{1,0:T(1,128)}', space=vmem, size = 0x9000, scoped, tag = 'internal scratch']
  %s0 = inlined_call_operand.hbm [shape: bf16[32,64], index: 0, kind: input, shape index: {}]
  %s1 = inlined_call_operand.hbm [shape: bf16[64,128], index: 1, kind: input, shape index: {}]
  %s2 = inlined_call_operand.vmem [shape: f32[1,128], index: 2, kind: input, shape index: {}]
  %s3 = inlined_call_operand.vmem [shape: f32[1,128], index: 3, kind: input, shape index: {}]
  %s4 = inlined_call_operand.vmem [shape: f32[1,128], index: 4, kind: input, shape index: {}]
  %s5 = inlined_call_operand.hbm [shape: bf16[32,128], index: 5, kind: output, shape index: {}]
  %s6 = sld [smem:[#allocation0]]
  $region61: #{tpu_custom_call.1} parent=0
    _
  %s8 = ssub.s32 1, %s6
  %s9 = scalar_select 0, %s8, %s6
  $region1: #{tpu_custom_call.1} parent=0
    #allocation2 [shape = 'u8[8192]{0}', space=vmem, size = 0x2000, scoped, tag = 'input window, operand 0']
    #allocation3 [shape = 's32[2]{0}', space=sflag, size = 0x8, scoped, tag = 'scoped memory for tpu_custom_call.1']
    #allocation4 [shape = 's32[2]{0}', space=sflag, size = 0x8, scoped, tag = 'scoped memory for tpu_custom_call.1']
    #allocation5 [shape = 'u8[16384]{0}', space=vmem, size = 0x4000, scoped, tag = 'input window, operand 1, single buffered']
    #allocation6 [shape = 's32[1]{0}', space=sflag, size = 0x4, scoped, tag = 'scoped memory for tpu_custom_call.1']
    #allocation7 [shape = 'u8[8192]{0}', space=vmem, size = 0x2000, scoped, tag = 'output window, operand 0']
    %10 = vsyncpa [#allocation3], 0
    %s11 = scalar_lea.sflag [#allocation3], 1
    %12 = vsyncpa %s11, 0
    %13 = vsyncpa [#allocation6], 0
    %14 = vsyncpa [#allocation4], 0
    %s15 = scalar_lea.sflag [#allocation4], 1
    %16 = vsyncpa %s15, 0
    loop: start=0, step=1, limit=4
    $region2: #{tpu_custom_call.1} parent=1 // loop_pre_header
      _
    $region3: #{tpu_custom_call.1} parent=1 // loop_header
      %s18 = sphi 0, %s22
      %p19 = scmp.ge.s32.totalorder %s18, 4
      %s28 = sphi 0, %s30
      %s31 = sphi 0, %s28
      %s32 = sphi 0, %s31
      %s48 = sphi 0, %s32
      %s52 = sphi 0, %s52
      %s54 = sphi 0, %s52
      %s55 = sphi 0, %s54
      %s69 = sphi 0, %s55
      %s73 = sphi 0, %s73
      %s75 = sphi 0, %s73
      %s76 = sphi 0, %s75
      %s90 = sphi 0, %s76
      %s94 = sphi 0, %s94
      %s96 = sphi 0, %s94
      %s97 = sphi 0, %s96
      %s111 = sphi 0, %s97
      %s115 = sphi 0, %s115
      %s117 = sphi 0, %s115
      %s118 = sphi 0, %s117
      %s132 = sphi 0, %s118
      %s138 = sphi 0, %s140
      %s141 = sphi 0, %s138
      %s142 = sphi 0, %s141
      %s158 = sphi 0, %s142
    $region4: #{tpu_custom_call.1} parent=1 // loop_header_branch
      %21 = sbr.rel (%p19) target = $region8
    $region5: #{tpu_custom_call.1} parent=1 // loop_body
      %s23 = ssub.s32 %s18, 1
      %s24 = ssub.s32 %s18, 2
      %s25 = sadd.s32 %s18, 1
      %s26 = ssub.s32 %s18, %s25
      %p27 = scmp.eq.s32.totalorder %s26, 0
      %s29 = sadd.s32 %s28, 1
      %s30 = scalar_select %p27, %s28, %s29
      %p33 = pneg %p27
      %p34 = scmp.eq.s32.totalorder %s18, 1
      %p35 = por %p33, %p34
      %p36 = scmp.ne.s32.totalorder %s28, %s31
      %p37 = scmp.eq.s32.totalorder %s18, 0
      %p38 = por %p36, %p37
      %p39 = scmp.ne.s32.totalorder %s28, %s31
      %p40 = scmp.eq.s32.totalorder %s23, 1
      %p41 = por %p39, %p40
      %p42 = scmp.ne.s32.totalorder %s31, %s32
      %p43 = scmp.eq.s32.totalorder %s23, 0
      %p44 = por %p42, %p43
      %p45 = scmp.ne.s32.totalorder %s31, %s32
      %p46 = scmp.eq.s32.totalorder %s24, 1
      %p47 = por %p45, %p46
      %p49 = scmp.ne.s32.totalorder %s32, %s48
      %p50 = scmp.eq.s32.totalorder %s24, 0
      %p51 = por %p49, %p50
      %s53 = sadd.s32 %s52, 1
      %p56 = scmp.eq.s32.totalorder %s18, 1
      %p57 = scmp.ne.s32.totalorder %s52, %s54
      %p58 = scmp.eq.s32.totalorder %s18, 0
      %p59 = por %p57, %p58
      %p60 = scmp.ne.s32.totalorder %s52, %s54
      %p61 = scmp.eq.s32.totalorder %s23, 1
      %p62 = por %p60, %p61
      %p63 = scmp.ne.s32.totalorder %s54, %s55
      %p64 = scmp.eq.s32.totalorder %s23, 0
      %p65 = por %p63, %p64
      %p66 = scmp.ne.s32.totalorder %s54, %s55
      %p67 = scmp.eq.s32.totalorder %s24, 1
      %p68 = por %p66, %p67
      %p70 = scmp.ne.s32.totalorder %s55, %s69
      %p71 = scmp.eq.s32.totalorder %s24, 0
      %p72 = por %p70, %p71
      %s74 = sadd.s32 %s73, 1
      %p77 = scmp.eq.s32.totalorder %s18, 1
      %p78 = scmp.ne.s32.totalorder %s73, %s75
      %p79 = scmp.eq.s32.totalorder %s18, 0
      %p80 = por %p78, %p79
      %p81 = scmp.ne.s32.totalorder %s73, %s75
      %p82 = scmp.eq.s32.totalorder %s23, 1
      %p83 = por %p81, %p82
      %p84 = scmp.ne.s32.totalorder %s75, %s76
      %p85 = scmp.eq.s32.totalorder %s23, 0
      %p86 = por %p84, %p85
      %p87 = scmp.ne.s32.totalorder %s75, %s76
      %p88 = scmp.eq.s32.totalorder %s24, 1
      %p89 = por %p87, %p88
      %p91 = scmp.ne.s32.totalorder %s76, %s90
      %p92 = scmp.eq.s32.totalorder %s24, 0
      %p93 = por %p91, %p92
      %s95 = sadd.s32 %s94, 1
      %p98 = scmp.eq.s32.totalorder %s18, 1
      %p99 = scmp.ne.s32.totalorder %s94, %s96
      %p100 = scmp.eq.s32.totalorder %s18, 0
      %p101 = por %p99, %p100
      %p102 = scmp.ne.s32.totalorder %s94, %s96
      %p103 = scmp.eq.s32.totalorder %s23, 1
      %p104 = por %p102, %p103
      %p105 = scmp.ne.s32.totalorder %s96, %s97
      %p106 = scmp.eq.s32.totalorder %s23, 0
      %p107 = por %p105, %p106
      %p108 = scmp.ne.s32.totalorder %s96, %s97
      %p109 = scmp.eq.s32.totalorder %s24, 1
      %p110 = por %p108, %p109
      %p112 = scmp.ne.s32.totalorder %s97, %s111
      %p113 = scmp.eq.s32.totalorder %s24, 0
      %p114 = por %p112, %p113
      %s116 = sadd.s32 %s115, 1
      %p119 = scmp.eq.s32.totalorder %s18, 1
      %p120 = scmp.ne.s32.totalorder %s115, %s117
      %p121 = scmp.eq.s32.totalorder %s18, 0
      %p122 = por %p120, %p121
      %p123 = scmp.ne.s32.totalorder %s115, %s117
      %p124 = scmp.eq.s32.totalorder %s23, 1
      %p125 = por %p123, %p124
      %p126 = scmp.ne.s32.totalorder %s117, %s118
      %p127 = scmp.eq.s32.totalorder %s23, 0
      %p128 = por %p126, %p127
      %p129 = scmp.ne.s32.totalorder %s117, %s118
      %p130 = scmp.eq.s32.totalorder %s24, 1
      %p131 = por %p129, %p130
      %p133 = scmp.ne.s32.totalorder %s118, %s132
      %p134 = scmp.eq.s32.totalorder %s24, 0
      %p135 = por %p133, %p134
      %s136 = ssub.s32 %s18, %s25
      %p137 = scmp.eq.s32.totalorder %s136, 0
      %s139 = sadd.s32 %s138, 1
      %s140 = scalar_select %p137, %s138, %s139
      %p143 = pneg %p137
      %p144 = scmp.eq.s32.totalorder %s18, 1
      %p145 = por %p143, %p144
      %p146 = scmp.ne.s32.totalorder %s138, %s141
      %p147 = scmp.eq.s32.totalorder %s18, 0
      %p148 = por %p146, %p147
      %p149 = scmp.ne.s32.totalorder %s138, %s141
      %p150 = scmp.eq.s32.totalorder %s23, 1
      %p151 = por %p149, %p150
      %p152 = scmp.ne.s32.totalorder %s141, %s142
      %p153 = scmp.eq.s32.totalorder %s23, 0
      %p154 = por %p152, %p153
      %p155 = scmp.ne.s32.totalorder %s141, %s142
      %p156 = scmp.eq.s32.totalorder %s24, 1
      %p157 = por %p155, %p156
      %p159 = scmp.ne.s32.totalorder %s142, %s158
      %p160 = scmp.eq.s32.totalorder %s24, 0
      %p161 = por %p159, %p160
      %p162 = scmp.le.s32.totalorder 1, %s18
      %p163 = scmp.lt.s32.totalorder %s18, 3
      %p164 = pnand %p162, %p163
      %p165 = pneg %p164
      // Predicated region
      $region9: #{tpu_custom_call.1} parent=5 // pred_check
        _
      $region10: #{tpu_custom_call.1} parent=5 // pred_check_branch
        %167 = sbr.rel (%p164) target = $region12
      $region11: #{tpu_custom_call.1} parent=5 // pred_region
        %s168 = ssub.s32 %s18, 1
        // Predicated region
        $region13: #{tpu_custom_call.1} parent=11 // pred_check
          %p169 = pneg %p65
        $region14: #{tpu_custom_call.1} parent=11 // pred_check_branch
          %171 = sbr.rel (%p169) target = $region16
        $region15: #{tpu_custom_call.1} parent=11 // pred_region
          %173 = vsyncadd [#allocation6], 0
          %s174 = sshll.u32 %s1, 4
          %s175 = int_to_ptr.hbm [resolvable:$true] %s174
          %s176 = sshll.u32 [#allocation5], 4
          %s177 = int_to_ptr.vmem [resolvable:$true] %s176
          %182 = dma.hbm_to_vmem [thread:$0]  %s175, 512, %s177, [#allocation6], 64, 64, 4
        $region16: #{tpu_custom_call.1} parent=11 // pred_fallthru
          _
        // Predicated region
        $region17: #{tpu_custom_call.1} parent=11 // pred_check
          %p183 = pneg %p86
        $region18: #{tpu_custom_call.1} parent=11 // pred_check_branch
          %185 = sbr.rel (%p183) target = $region20
        $region19: #{tpu_custom_call.1} parent=11 // pred_region
          _
        $region20: #{tpu_custom_call.1} parent=11 // pred_fallthru
          _
        // Predicated region
        $region21: #{tpu_custom_call.1} parent=11 // pred_check
          %p186 = pneg %p107
        $region22: #{tpu_custom_call.1} parent=11 // pred_check_branch
          %188 = sbr.rel (%p186) target = $region24
        $region23: #{tpu_custom_call.1} parent=11 // pred_region
          _
        $region24: #{tpu_custom_call.1} parent=11 // pred_fallthru
          _
        // Predicated region
        $region25: #{tpu_custom_call.1} parent=11 // pred_check
          %p189 = pneg %p128
        $region26: #{tpu_custom_call.1} parent=11 // pred_check_branch
          %191 = sbr.rel (%p189) target = $region28
        $region27: #{tpu_custom_call.1} parent=11 // pred_region
          _
        $region28: #{tpu_custom_call.1} parent=11 // pred_fallthru
          _
      $region12: #{tpu_custom_call.1} parent=5 // pred_fallthru
        _
      %p192 = scmp.lt.s32.totalorder %s18, 2
      // Predicated region
      $region29: #{tpu_custom_call.1} parent=5 // pred_check
        %p193 = pneg %p192
      $region30: #{tpu_custom_call.1} parent=5 // pred_check_branch
        %195 = sbr.rel (%p193) target = $region32
      $region31: #{tpu_custom_call.1} parent=5 // pred_region
        // Predicated region
        $region33: #{tpu_custom_call.1} parent=31 // pred_check
          %p196 = pneg %p38
        $region34: #{tpu_custom_call.1} parent=31 // pred_check_branch
          %198 = sbr.rel (%p196) target = $region36
        $region35: #{tpu_custom_call.1} parent=31 // pred_region
          %s199 = sand.u32 %s28, 1
          %s200 = scalar_lea.sflag [#allocation3], %s199
          %s201 = sand.u32 %s28, 1
          %s202 = smul.addr %s201, 8
          %s203 = scalar_lea.vmem [#allocation2], %s202
          %s204 = smul.u32 2, %s18
          %206 = vsyncadd %s200, 0
          %s207 = smul.addr %s204, 4
          %s208 = scalar_lea.hbm %s0, %s207
          %s209 = sshll.u32 %s208, 4
          %s210 = int_to_ptr.hbm [resolvable:$true] %s209
          %s211 = sshll.u32 %s203, 4
          %s212 = int_to_ptr.vmem [resolvable:$true] %s211
          %217 = dma.hbm_to_vmem [thread:$0]  %s210, 128, %s212, %s200, 64, 64, 4
        $region36: #{tpu_custom_call.1} parent=31 // pred_fallthru
          _
      $region32: #{tpu_custom_call.1} parent=5 // pred_fallthru
        _
      %p218 = scmp.le.s32.totalorder 1, %s18
      %p219 = scmp.lt.s32.totalorder %s18, 3
      %p220 = pnand %p218, %p219
      %p221 = pneg %p220
      // Predicated region
      $region37: #{tpu_custom_call.1} parent=5 // pred_check
        _
      $region38: #{tpu_custom_call.1} parent=5 // pred_check_branch
        %223 = sbr.rel (%p220) target = $region40
      $region39: #{tpu_custom_call.1} parent=5 // pred_region
        %s224 = ssub.s32 %s18, 1
        %s225 = sand.u32 %s31, 1
        %s226 = scalar_lea.sflag [#allocation3], %s225
        %s227 = sand.u32 %s31, 1
        %s228 = smul.addr %s227, 8
        %s229 = scalar_lea.vmem [#allocation2], %s228
        // Predicated region
        $region41: #{tpu_custom_call.1} parent=39 // pred_check
          %p230 = pneg %p44
        $region42: #{tpu_custom_call.1} parent=39 // pred_check_branch
          %232 = sbr.rel (%p230) target = $region44
        $region43: #{tpu_custom_call.1} parent=39 // pred_region
          %234 = dma.done %s226, 128
        $region44: #{tpu_custom_call.1} parent=39 // pred_fallthru
          _
        // Predicated region
        $region45: #{tpu_custom_call.1} parent=39 // pred_check
          %p235 = pneg %p65
        $region46: #{tpu_custom_call.1} parent=39 // pred_check_branch
          %237 = sbr.rel (%p235) target = $region48
        $region47: #{tpu_custom_call.1} parent=39 // pred_region
          %239 = dma.done [#allocation6], 512
        $region48: #{tpu_custom_call.1} parent=39 // pred_fallthru
          _
        %s240 = sand.u32 %s31, 1
        %s241 = scalar_lea.sflag [#allocation3], %s240
        %s242 = sand.u32 %s31, 1
        %s243 = smul.addr %s242, 8
        %s244 = scalar_lea.vmem [#allocation2], %s243
        %p245 = pneg %p44
        %p246 = pneg %p41
        %p247 = pneg %p65
        %p248 = pneg %p62
        %p249 = pneg %p86
        %p250 = pneg %p83
        %p251 = pneg %p107
        %p252 = pneg %p104
        %p253 = pneg %p128
        %p254 = pneg %p125
        %p255 = pneg %p154
        %p256 = pneg %p151
        %s257 = sand.u32 %s141, 1
        %s258 = scalar_lea.sflag [#allocation4], %s257
        %s259 = sand.u32 %s141, 1
        %s260 = smul.addr %s259, 8
        %s261 = scalar_lea.vmem [#allocation7], %s260
        %s262 = smul.u32 2, %s23
        %s263 = smul.u32 2, %s23
        %v265 = vld [vmem:[%s229] sm:$0xf]
        %v266 = vld [vmem:[%s229 + $0x4] sm:$0xf]
        %v267 = vld [vmem:[#allocation5] sm:$0xf]
        %v268 = vld [vmem:[#allocation5 + $0x4] sm:$0xf]
        %v269 = vld [vmem:[#allocation5 + $0x8] sm:$0xf]
        %v270 = vld [vmem:[#allocation5 + $0xc] sm:$0xf]
        %v271 = vld [vmem:[#allocation5 + $0x10] sm:$0xf]
        %v272 = vld [vmem:[#allocation5 + $0x14] sm:$0xf]
        %v273 = vld [vmem:[#allocation5 + $0x18] sm:$0xf]
        %v274 = vld [vmem:[#allocation5 + $0x1c] sm:$0xf]
        %v275 = vld [vmem:[%s2] sm:$0x1]
        %v277 = vperm.slane %v275, 0
        %v281 = vunpack.c.l.b16 %v265
        %v282 = vunpack.c.l.b16 %v266
        %v283 = vpack.c.b16 %v282, %v281
        %v292 = vunpack.c.l.b16 %v267
        %v293 = vunpack.c.l.b16 %v268
        %v294 = vunpack.c.l.b16 %v269
        %v295 = vunpack.c.l.b16 %v270
        %v296 = vunpack.c.l.b16 %v271
        %v297 = vunpack.c.l.b16 %v272
        %v298 = vunpack.c.l.b16 %v273
        %v299 = vunpack.c.l.b16 %v274
        %v300 = vpack.c.b16 %v293, %v292
        %v301 = vpack.c.b16 %v295, %v294
        %v302 = vpack.c.b16 %v297, %v296
        %v303 = vpack.c.b16 %v299, %v298
        %vm308 = vcmask 523264
        %v310 = vsel %vm308, %v283, 0
        %312 = vmatpush.bf16.msra.mxu0 0
        %313 = vmatpush.bf16.msra.mxu0 0
        %314 = vmatpush.bf16.msra.mxu0 0
        %315 = vmatpush.bf16.msra.mxu0 0
        %316 = vmatpush.bf16.msra.mxu0 %v303
        %317 = vmatpush.bf16.msra.mxu0 %v302
        %318 = vmatpush.bf16.msra.mxu0 %v301
        %319 = vmatpush.bf16.msra.mxu0 %v300
        %320 = vmatmul.bf16.gmra.mxu0 %v310
        %v321 = vpop.f32.mrf.mxu0
        %v322 = vadd.f32 %v277, %v321
        %v323 = vpop.f32.mrf.mxu0
        %v324 = vadd.f32 %v277, %v323
        %325 = vdwg.mxu0
        %v326 = vmul.f32 %v322, %v322
        %v327 = vmul.f32 %v324, %v324
        %328 = vadd.xlane.f32.xlu0 %v326
        %v329 = vpop.xlane.xlu0 %328
        %330 = vadd.xlane.f32.xlu0 %v327
        %v331 = vpop.xlane.xlu0 %330
        %v332 = vsub.f32 %v329, %v326
        %v333 = vsub.f32 %v331, %v327
        %v334 = vmul.f32 %v322, 0.03125
        %v335 = vmul.f32 %v324, 0.03125
        %v336 = vmul.f32 %v332, 0.03125
        %v337 = vmul.f32 %v333, 0.03125
        %v338 = vmul.f32 %v334, %v334
        %v339 = vmul.f32 %v335, %v335
        %v340 = vsub.f32 %v336, %v338
        %v341 = vsub.f32 %v337, %v339
        %343 = vset.pattern.permute.xlu0 32
        %344 = vperm.xlu0 %343, %v334
        %v345 = vpop.permute.xlu0 %344
        %348 = vset.pattern.permute.xlu0 32
        %349 = vperm.xlu0 %348, %v335
        %v350 = vpop.permute.xlu0 %349
        %v352 = vsub.f32 %v322, %v345
        %v353 = vsub.f32 %v324, %v350
        %v354 = vadd.f32 %v340, 1e-05
        %v355 = vadd.f32 %v341, 1e-05
        %v356 = vrsqrt.pop %v354
        %v357 = vmul.f32 %v356, %v354
        %v358 = vmul.f32 %v357, %v356
        %v359 = vmul.f32 0.5, %v358
        %v360 = vsub.f32 1.5, %v359
        %v361 = vmul.f32 %v356, %v360
        %vm362 = vweird.f32 %v354
        %vm363 = vweird.f32 %v356
        %vm364 = vmor %vm362, %vm363
        %v365 = vsel %vm364, %v356, %v361
        %v366 = vrsqrt.pop %v355
        %v367 = vmul.f32 %v366, %v355
        %v368 = vmul.f32 %v367, %v366
        %v369 = vmul.f32 0.5, %v368
        %v370 = vsub.f32 1.5, %v369
        %v371 = vmul.f32 %v366, %v370
        %vm372 = vweird.f32 %v355
        %vm373 = vweird.f32 %v366
        %vm374 = vmor %vm372, %vm373
        %v375 = vsel %vm374, %v366, %v371
        %377 = vset.pattern.permute.xlu0 32
        %378 = vperm.xlu0 %377, %v365
        %v379 = vpop.permute.xlu0 %378
        %382 = vset.pattern.permute.xlu0 32
        %383 = vperm.xlu0 %382, %v375
        %v384 = vpop.permute.xlu0 %383
        %v386 = vmul.f32 %v352, %v379
        %v387 = vmul.f32 %v353, %v384
        %v388 = vld [vmem:[%s3] sm:$0x1]
        %v390 = vperm.slane %v388, 0
        %v392 = vmul.f32 %v386, %v390
        %v393 = vmul.f32 %v387, %v390
        %v394 = vld [vmem:[%s4] sm:$0x1]
        %v396 = vperm.slane %v394, 0
        %v398 = vadd.f32 %v392, %v396
        %v399 = vadd.f32 %v393, %v396
        %v400 = vpack.c.bf16 %v398, %v398
        %v401 = vpack.c.bf16 %v399, %v399
        %402 = vst [vmem:[%s261] sm:$0xf] %v400
        %403 = vst [vmem:[%s261 + $0x4] sm:$0xf] %v401
        %s404 = sand.u32 %s141, 1
        %s405 = scalar_lea.sflag [#allocation4], %s404
        %s406 = sand.u32 %s141, 1
        %s407 = smul.addr %s406, 8
        %s408 = scalar_lea.vmem [#allocation7], %s407
        // Predicated region
        $region49: #{tpu_custom_call.1} parent=39 // pred_check
          %p409 = pneg %p151
        $region50: #{tpu_custom_call.1} parent=39 // pred_check_branch
          %411 = sbr.rel (%p409) target = $region52
        $region51: #{tpu_custom_call.1} parent=39 // pred_region
          %s412 = smul.u32 2, %s23
          %414 = vsyncadd %s405, 0
          %s415 = smul.addr %s412, 4
          %s416 = scalar_lea.hbm %s5, %s415
          %s417 = sshll.u32 %s408, 4
          %s418 = int_to_ptr.vmem [resolvable:$true] %s417
          %s419 = sshll.u32 %s416, 4
          %s420 = int_to_ptr.hbm [resolvable:$true] %s419
          %425 = dma.vmem_to_hbm [thread:$0]  %s418, 128, %s420, %s405, 64, 64, 4
        $region52: #{tpu_custom_call.1} parent=39 // pred_fallthru
          _
      $region40: #{tpu_custom_call.1} parent=5 // pred_fallthru
        _
      %p426 = scmp.le.s32.totalorder 2, %s18
      // Predicated region
      $region53: #{tpu_custom_call.1} parent=5 // pred_check
        %p427 = pneg %p426
      $region54: #{tpu_custom_call.1} parent=5 // pred_check_branch
        %429 = sbr.rel (%p427) target = $region56
      $region55: #{tpu_custom_call.1} parent=5 // pred_region
        %s430 = ssub.s32 %s18, 2
        // Predicated region
        $region57: #{tpu_custom_call.1} parent=55 // pred_check
          %p431 = pneg %p157
        $region58: #{tpu_custom_call.1} parent=55 // pred_check_branch
          %433 = sbr.rel (%p431) target = $region60
        $region59: #{tpu_custom_call.1} parent=55 // pred_region
          %s434 = sand.u32 %s142, 1
          %s435 = scalar_lea.sflag [#allocation4], %s434
          %s436 = sand.u32 %s142, 1
          %s437 = smul.addr %s436, 8
          %s438 = scalar_lea.vmem [#allocation7], %s437
          %440 = dma.done %s435, 128
        $region60: #{tpu_custom_call.1} parent=55 // pred_fallthru
          _
      $region56: #{tpu_custom_call.1} parent=5 // pred_fallthru
        _
    $region6: #{tpu_custom_call.1} parent=1 // loop_footer
      %s22 = sadd.s32 1, %s18
    $region7: #{tpu_custom_call.1} parent=1 // loop_footer_branch
      %17 = sbr.rel target = $region3
    $region8: #{tpu_custom_call.1} parent=1 // loop_exit
      _
    %441 = vsyncpa [#allocation3], 1
    %s442 = scalar_lea.sflag [#allocation3], 1
    %443 = vsyncpa %s442, 1
    %444 = vsyncpa [#allocation6], 1
    %445 = vsyncpa [#allocation4], 1
    %s446 = scalar_lea.sflag [#allocation4], 1
    %447 = vsyncpa %s446, 1

</llo_original>
